<compile_context>
chip_gen: v5e
topology: v5e:2x2
jax: 0.10.0
libtpu: 0.0.40
codegen_flags: <defaults>
</compile_context>

<pallas_src>
import math

import jax
import jax.numpy as jnp
from jax.experimental import pallas as pl
from jax.experimental.pallas import tpu as pltpu

EPS = 1e-5


# --------------------------- in-kernel helpers ---------------------------

def _conv3_taps(x, w_ref, edge):
    """3-tap 'same' conv on a folded (C, W) slab as three accumulated MXU matmuls.

    x:     (C, W)  compute dtype; lane index j = n_local * L + l
    w_ref: (3, Cout, C) VMEM ref, tap-major
    edge:  (2, W)  compute dtype {0,1}; row0 = (l != 0), row1 = (l != L-1)
    returns (Cout, W) float32 (pre-bias conv output)
    """
    W = x.shape[1]
    # Shifted taps via XLU roll; the edge masks kill out-of-sample taps and the cyclic
    # wrap at tile edges (tiles always contain whole samples).
    x_m1 = pltpu.roll(x, shift=1, axis=1) * edge[0:1, :]
    x_p1 = pltpu.roll(x, shift=W - 1, axis=1) * edge[1:2, :]
    y = jnp.dot(w_ref[0], x_m1, preferred_element_type=jnp.float32)
    y = y + jnp.dot(w_ref[1], x, preferred_element_type=jnp.float32)
    y = y + jnp.dot(w_ref[2], x_p1, preferred_element_type=jnp.float32)
    return y


def _packed_stats(y):
    """Per-tile sum / sum-of-squares packed into a single (1, Cout, 2) block."""
    s = jnp.sum(y, axis=1, keepdims=True)
    ss = jnp.sum(y * y, axis=1, keepdims=True)
    return jnp.concatenate([s, ss], axis=1)[None]


# ------------------------------- kernels ---------------------------------

def _conv_stats_kernel(x_ref, w_ref, edge_ref, y_ref, st_ref):
    # Input slab pad lanes are exactly zero -> pre-bias conv output is zero there,
    # so the packed stats need no validity mask.
    y = _conv3_taps(x_ref[...], w_ref, edge_ref[...])          # (Cout, W) f32
    st_ref[...] = _packed_stats(y)
    y_ref[...] = y.astype(y_ref.dtype)


def _bn_relu_conv_stats_kernel(y_ref, scale_ref, shift_ref, w_ref, edge_ref, valid_ref,
                               z_ref, st_ref):
    # BN1 affine + ReLU in f32; multiply by the resident validity mask so pad lanes of
    # h (and hence of the conv2 pre-bias output) are exactly zero -> unmasked stats.
    h = jnp.maximum(y_ref[...] * scale_ref[...] + shift_ref[...], 0.0) * valid_ref[...]
    z = _conv3_taps(h.astype(y_ref.dtype), w_ref, edge_ref[...])
    st_ref[...] = _packed_stats(z)
    z_ref[...] = z.astype(z_ref.dtype)


# ---------------------------- host-side glue ------------------------------

def _bn_scale_shift(stats, gamma_p, beta_p, count):
    """Fold per-tile partial pre-bias sums into train-mode BN scale/shift.

    Slabs hold pre-bias conv outputs p; since y = p + b and BN subtracts the batch
    mean, the conv bias cancels: BN(y) = (p - E[p]) * gamma/sqrt(Var(p)+eps) + beta.
    """
    s = jnp.sum(stats[:, :, 0], axis=0)                         # (Cout_p,)
    ss = jnp.sum(stats[:, :, 1], axis=0)
    mean = s / count
    var = ss / count - mean * mean                              # biased variance
    scale = gamma_p * jax.lax.rsqrt(var + EPS)
    shift = beta_p - mean * scale
    return scale[:, None], shift[:, None]                       # (Cout_p, 1)


def _pick_lane_tile(NL, L, c_max_pad, itemsize):
    """Lane-tile width: whole samples, multiple of 128, sized from a VMEM budget."""
    min_tw = L * 128 // math.gcd(L, 128)                        # lcm(L, 128)
    tiles_needed = -(-NL // min_tw)
    # Target ~4 MiB of activation bytes per block, capped at 8192 lanes (review range),
    # but keep >= 2 grid steps when the problem allows (v7x megacore balance).
    target_lanes = max(min_tw, min(8192, (4 << 20) // max(1, c_max_pad * itemsize)))
    k = max(1, min(target_lanes // min_tw, max(1, tiles_needed // 2)))
    return min_tw * k


def _prep_w(w, co_p, ci_p, dtype):
    """(Cout, Cin, 3) -> zero-padded tap-major (3, Cout_p, Cin_p)."""
    co, ci, _ = w.shape
    wt = jnp.transpose(w, (2, 0, 1))
    wt = jnp.pad(wt, ((0, 0), (0, co_p - co), (0, ci_p - ci)))
    return wt.astype(dtype)


def _pad1(v, n_p):
    return jnp.pad(v.astype(jnp.float32), (0, n_p - v.shape[0]))


def double_conv(x, params, *, compute_dtype=jnp.float32, lane_tile=None,
                vmem_limit_bytes=48 * 1024 * 1024):
    """x: (N, Cin, L) float32 -> (N, Cout, L) float32 (training-mode BatchNorm)."""
    w1, b1, g1, be1, w2, b2, g2, be2 = params
    del b1, b2  # conv bias before train-mode BatchNorm cancels exactly in the forward
    N, Cin, L = x.shape
    Cout = w1.shape[0]
    NL = N * L

    itemsize = jnp.dtype(compute_dtype).itemsize
    sub = 32 // itemsize                        # sublane packing: 8 (f32) / 16 (bf16)
    Cin_p = -(-Cin // sub) * sub
    Cout_p = -(-Cout // sub) * sub

    # ---- lane tiling: whole samples per tile, tile width a multiple of 128 ----
    if lane_tile is None:
        lane_tile = _pick_lane_tile(NL, L, max(Cin_p, Cout_p), itemsize)
    assert lane_tile % L == 0 and lane_tile % 128 == 0
    T = -(-NL // lane_tile)                     # number of lane tiles (grid size)
    Wpad = T * lane_tile

    # ---- fold batch into lanes; zero-pad channels (sublane) and lanes ----
    x2d = jnp.transpose(x, (1, 0, 2)).reshape(Cin, NL)
    x2d = jnp.pad(x2d, ((0, Cin_p - Cin), (0, Wpad - NL))).astype(compute_dtype)
    w1s = _prep_w(w1, Cout_p, Cin_p, compute_dtype)
    w2s = _prep_w(w2, Cout_p, Cout_p, compute_dtype)

    # Hoisted masks: edge masks are identical for every tile (lane_tile % L == 0);
    # the validity mask is blocked per tile (only the last tile has pad lanes).
    lane = jnp.arange(lane_tile, dtype=jnp.int32) % L
    edge = jnp.stack([lane != 0, lane != (L - 1)]).astype(compute_dtype)   # (2, tile)
    valid = (jnp.arange(Wpad, dtype=jnp.int32) < NL).astype(jnp.float32)[None]

    cparams = pltpu.CompilerParams(
        dimension_semantics=("parallel",),      # split lane tiles across TCs (v7x)
        vmem_limit_bytes=vmem_limit_bytes)

    act_spec = lambda c: pl.BlockSpec((c, lane_tile), lambda i: (0, i))
    res_spec = lambda shape: pl.BlockSpec(shape, lambda i: (0,) * len(shape))
    edge_spec = res_spec((2, lane_tile))
    valid_spec = pl.BlockSpec((1, lane_tile), lambda i: (0, i))
    stat_spec = pl.BlockSpec((1, Cout_p, 2), lambda i: (i, 0, 0))
    stat_shape = jax.ShapeDtypeStruct((T, Cout_p, 2), jnp.float32)

    # ---- pass 1: conv1 (pre-bias) + packed partial BN1 stats ------------------
    y2d, st1 = pl.pallas_call(
        _conv_stats_kernel,
        grid=(T,),
        in_specs=[act_spec(Cin_p), res_spec((3, Cout_p, Cin_p)), edge_spec],
        out_specs=[act_spec(Cout_p), stat_spec],
        out_shape=(jax.ShapeDtypeStruct((Cout_p, Wpad), compute_dtype), stat_shape),
        compiler_params=cparams,
    )(x2d, w1s, edge)
    scale1, shift1 = _bn_scale_shift(st1, _pad1(g1, Cout_p), _pad1(be1, Cout_p), NL)

    # ---- pass 2: bn1 + relu + conv2 (pre-bias) + packed partial BN2 stats ------
    z2d, st2 = pl.pallas_call(
        _bn_relu_conv_stats_kernel,
        grid=(T,),
        in_specs=[act_spec(Cout_p), res_spec((Cout_p, 1)), res_spec((Cout_p, 1)),
                  res_spec((3, Cout_p, Cout_p)), edge_spec, valid_spec],
        out_specs=[act_spec(Cout_p), stat_spec],
        out_shape=(jax.ShapeDtypeStruct((Cout_p, Wpad), compute_dtype), stat_shape),
        compiler_params=cparams,
    )(y2d, scale1, shift1, w2s, edge, valid)
    scale2, shift2 = _bn_scale_shift(st2, _pad1(g2, Cout_p), _pad1(be2, Cout_p), NL)

    # ---- epilogue: bn2 + relu fused by XLA into the mandatory unfold transpose ----
    z = z2d[:Cout, :NL].astype(jnp.float32)
    out2d = jnp.maximum(z * scale2[:Cout] + shift2[:Cout], 0.0)
    return jnp.transpose(out2d.reshape(Cout, N, L), (1, 0, 2))


# --------------------------- pure-JAX reference ----------------------------

def ref_forward(x, params):
    """Matches PyTorch DoubleConv forward in train() mode (batch stats, biased var)."""
    w1, b1, g1, be1, w2, b2, g2, be2 = params

    def conv(x, w, b):
        y = jax.lax.conv_general_dilated(
            x, w, window_strides=(1,), padding=((1, 1),),
            dimension_numbers=('NCH', 'OIH', 'NCH'))
        return y + b[None, :, None]

    def bn_relu(y, g, be):
        mean = y.mean(axis=(0, 2), keepdims=True)
        var = ((y - mean) ** 2).mean(axis=(0, 2), keepdims=True)
        y = (y - mean) / jnp.sqrt(var + EPS) * g[None, :, None] + be[None, :, None]
        return jnp.maximum(y, 0.0)

    y = bn_relu(conv(x, w1, b1), g1, be1)
    return bn_relu(conv(y, w2, b2), g2, be2)


if __name__ == "__main__":
    key = jax.random.PRNGKey(0)
    ks = jax.random.split(key, 12)

    Cin, Cout = 4, 8
    w1 = 0.2 * jax.random.normal(ks[1], (Cout, Cin, 3), jnp.float32)
    b1 = 0.1 * jax.random.normal(ks[2], (Cout,), jnp.float32)
    g1 = 1.0 + 0.1 * jax.random.normal(ks[3], (Cout,), jnp.float32)
    be1 = 0.1 * jax.random.normal(ks[4], (Cout,), jnp.float32)
    w2 = 0.2 * jax.random.normal(ks[5], (Cout, Cout, 3), jnp.float32)
    b2 = 0.1 * jax.random.normal(ks[6], (Cout,), jnp.float32)
    g2 = 1.0 + 0.1 * jax.random.normal(ks[7], (Cout,), jnp.float32)
    be2 = 0.1 * jax.random.normal(ks[8], (Cout,), jnp.float32)
    params = (w1, b1, g1, be1, w2, b2, g2, be2)

    dc = jax.jit(double_conv,
                 static_argnames=("compute_dtype", "lane_tile", "vmem_limit_bytes"))

    # Config 1: multi-tile grid (N*L = 256 -> two 128-lane tiles), f32 MXU operands.
    N, L = 4, 64
    x = jax.random.normal(ks[0], (N, Cin, L), jnp.float32)
    out = jax.block_until_ready(dc(x, params))
    ref = jax.block_until_ready(ref_forward(x, params))
    assert out.shape == (N, Cout, L)
    err = jnp.max(jnp.abs(out - ref))
    assert jnp.allclose(out, ref, atol=2e-4, rtol=2e-4), f"f32 max abs err {err}"

    # Config 2: lane-padding / pad-masking path (N*L = 32 -> one padded 128 tile).
    N2, L2 = 2, 16
    x2 = jax.random.normal(ks[9], (N2, Cin, L2), jnp.float32)
    out2 = jax.block_until_ready(dc(x2, params))
    ref2 = jax.block_until_ready(ref_forward(x2, params))
    assert out2.shape == (N2, Cout, L2)
    err2 = jnp.max(jnp.abs(out2 - ref2))
    assert jnp.allclose(out2, ref2, atol=2e-4, rtol=2e-4), f"pad max abs err {err2}"

    # Config 3: larger problem -> auto lane_tile growth (512 lanes, T=2).
    N3, L3 = 8, 128
    x3 = jax.random.normal(ks[10], (N3, Cin, L3), jnp.float32)
    out3 = jax.block_until_ready(dc(x3, params))
    ref3 = jax.block_until_ready(ref_forward(x3, params))
    err3 = jnp.max(jnp.abs(out3 - ref3))
    assert jnp.allclose(out3, ref3, atol=2e-4, rtol=2e-4), f"big max abs err {err3}"

    # Config 4: bf16 MXU operands / bf16 inter-pass slabs (v6e/v7x path), f32 stats.
    out_bf16 = jax.block_until_ready(dc(x, params, compute_dtype=jnp.bfloat16))
    err_bf16 = jnp.max(jnp.abs(out_bf16 - ref))
    assert err_bf16 < 0.3, f"bf16 max abs err {err_bf16}"

    print("KERNEL_OK")
</pallas_src>

<mosaic_0001>
module attributes {stable_mosaic.version = 11 : i64} {
  func.func @_conv_stats_kernel(%arg0: i32, %arg1: memref<8x128xf32, #tpu.memory_space<vmem>>, %arg2: memref<3x8x8xf32, #tpu.memory_space<vmem>>, %arg3: memref<2x128xf32, #tpu.memory_space<vmem>>, %arg4: memref<8x128xf32, #tpu.memory_space<vmem>>, %arg5: memref<1x8x2xf32, #tpu.memory_space<vmem>>) attributes {dimension_semantics = [#tpu.dimension_semantics<parallel>], iteration_bounds = array<i64: 2>, scalar_prefetch = 0 : i64, scratch_operands = 0 : i64, tpu.core_type = #tpu.core_type<tc>, window_params = [{transform_indices = @transform_0, window_bounds = array<i64: 8, 128>}, {pipeline_mode = #tpu.pipeline_mode<synchronous>, transform_indices = @transform_1, window_bounds = array<i64: 3, 8, 8>}, {pipeline_mode = #tpu.pipeline_mode<synchronous>, transform_indices = @transform_2, window_bounds = array<i64: 2, 128>}, {transform_indices = @transform_3, window_bounds = array<i64: 8, 128>}, {transform_indices = @transform_4, window_bounds = array<i64: 1, 8, 2>}]} {
    %c0 = arith.constant 0 : index
    %c0_0 = arith.constant 0 : index
    %0 = vector.load %arg1[%c0, %c0_0] : memref<8x128xf32, #tpu.memory_space<vmem>>, vector<8x128xf32>
    %c0_1 = arith.constant 0 : index
    %c0_2 = arith.constant 0 : index
    %1 = vector.load %arg3[%c0_1, %c0_2] : memref<2x128xf32, #tpu.memory_space<vmem>>, vector<2x128xf32>
    %c1_i32 = arith.constant 1 : i32
    %2 = tpu.dynamic_rotate %0 by %c1_i32 dim 1 : vector<8x128xf32>, i32 -> vector<8x128xf32>
    %3 = vector.extract_strided_slice %1 {offsets = [0, 0], sizes = [1, 128], strides = [1, 1]} : vector<2x128xf32> to vector<1x128xf32>
    %4 = vector.broadcast %3 : vector<1x128xf32> to vector<8x128xf32>
    %5 = arith.mulf %2, %4 : vector<8x128xf32>
    %c127_i32 = arith.constant 127 : i32
    %6 = tpu.dynamic_rotate %0 by %c127_i32 dim 1 : vector<8x128xf32>, i32 -> vector<8x128xf32>
    %7 = vector.extract_strided_slice %1 {offsets = [1, 0], sizes = [1, 128], strides = [1, 1]} : vector<2x128xf32> to vector<1x128xf32>
    %8 = vector.broadcast %7 : vector<1x128xf32> to vector<8x128xf32>
    %9 = arith.mulf %6, %8 : vector<8x128xf32>
    %c0_3 = arith.constant 0 : index
    %c0_4 = arith.constant 0 : index
    %c0_5 = arith.constant 0 : index
    %10 = vector.load %arg2[%c0_3, %c0_4, %c0_5] : memref<3x8x8xf32, #tpu.memory_space<vmem>>, vector<1x8x8xf32>
    %11 = vector.shape_cast %10 : vector<1x8x8xf32> to vector<8x8xf32>
    %cst = arith.constant dense<0.000000e+00> : vector<8x128xf32>
    %12 = tpu.matmul %11, %5, %cst {dimension_numbers = #tpu.dot_dimension_numbers<[1], [0], [0], [1], [0, 0, 1, 1], [], []>} : vector<8x8xf32>, vector<8x128xf32>, vector<8x128xf32> -> vector<8x128xf32>
    %c1 = arith.constant 1 : index
    %c0_6 = arith.constant 0 : index
    %c0_7 = arith.constant 0 : index
    %13 = vector.load %arg2[%c1, %c0_6, %c0_7] : memref<3x8x8xf32, #tpu.memory_space<vmem>>, vector<1x8x8xf32>
    %14 = vector.shape_cast %13 : vector<1x8x8xf32> to vector<8x8xf32>
    %cst_8 = arith.constant dense<0.000000e+00> : vector<8x128xf32>
    %15 = tpu.matmul %14, %0, %cst_8 {dimension_numbers = #tpu.dot_dimension_numbers<[1], [0], [0], [1], [0, 0, 1, 1], [], []>} : vector<8x8xf32>, vector<8x128xf32>, vector<8x128xf32> -> vector<8x128xf32>
    %16 = arith.addf %12, %15 : vector<8x128xf32>
    %c2 = arith.constant 2 : index
    %c0_9 = arith.constant 0 : index
    %c0_10 = arith.constant 0 : index
    %17 = vector.load %arg2[%c2, %c0_9, %c0_10] : memref<3x8x8xf32, #tpu.memory_space<vmem>>, vector<1x8x8xf32>
    %18 = vector.shape_cast %17 : vector<1x8x8xf32> to vector<8x8xf32>
    %cst_11 = arith.constant dense<0.000000e+00> : vector<8x128xf32>
    %19 = tpu.matmul %18, %9, %cst_11 {dimension_numbers = #tpu.dot_dimension_numbers<[1], [0], [0], [1], [0, 0, 1, 1], [], []>} : vector<8x8xf32>, vector<8x128xf32>, vector<8x128xf32> -> vector<8x128xf32>
    %20 = arith.addf %16, %19 : vector<8x128xf32>
    %cst_12 = arith.constant dense<0.000000e+00> : vector<8xf32>
    %21 = vector.multi_reduction <add>, %20, %cst_12 [1] : vector<8x128xf32> to vector<8xf32>
    %22 = vector.shape_cast %21 : vector<8xf32> to vector<8x1xf32>
    %23 = arith.mulf %20, %20 : vector<8x128xf32>
    %cst_13 = arith.constant dense<0.000000e+00> : vector<8xf32>
    %24 = vector.multi_reduction <add>, %23, %cst_13 [1] : vector<8x128xf32> to vector<8xf32>
    %25 = vector.shape_cast %24 : vector<8xf32> to vector<8x1xf32>
    %26 = tpu.concatenate %22, %25 in 1 : vector<8x1xf32>, vector<8x1xf32> -> vector<8x2xf32>
    %27 = vector.shape_cast %26 : vector<8x2xf32> to vector<1x8x2xf32>
    %c0_14 = arith.constant 0 : index
    %c0_15 = arith.constant 0 : index
    %c0_16 = arith.constant 0 : index
    %28 = vector.load %arg5[%c0_14, %c0_15, %c0_16] : memref<1x8x2xf32, #tpu.memory_space<vmem>>, vector<1x8x2xf32>
    tpu.vector_store %arg5[%c0_14, %c0_15, %c0_16], %27 {strides = array<i32>} : memref<1x8x2xf32, #tpu.memory_space<vmem>>, vector<1x8x2xf32>,
    %c0_17 = arith.constant 0 : index
    %c0_18 = arith.constant 0 : index
    %29 = vector.load %arg4[%c0_17, %c0_18] : memref<8x128xf32, #tpu.memory_space<vmem>>, vector<8x128xf32>
    tpu.vector_store %arg4[%c0_17, %c0_18], %20 {strides = array<i32>} : memref<8x128xf32, #tpu.memory_space<vmem>>, vector<8x128xf32>,
    return
  }
  func.func @transform_0(%arg0: i32) -> (i32, i32) {
    %c0_i32 = arith.constant 0 : i32
    %c0_i32_0 = arith.constant 0 : i32
    return %c0_i32, %arg0 : i32, i32
  }
  func.func @transform_1(%arg0: i32) -> (i32, i32, i32) {
    %c0_i32 = arith.constant 0 : i32
    %c0_i32_0 = arith.constant 0 : i32
    %c0_i32_1 = arith.constant 0 : i32
    %c0_i32_2 = arith.constant 0 : i32
    return %c0_i32, %c0_i32_0, %c0_i32_1 : i32, i32, i32
  }
  func.func @transform_2(%arg0: i32) -> (i32, i32) {
    %c0_i32 = arith.constant 0 : i32
    %c0_i32_0 = arith.constant 0 : i32
    %c0_i32_1 = arith.constant 0 : i32
    return %c0_i32, %c0_i32_0 : i32, i32
  }
  func.func @transform_3(%arg0: i32) -> (i32, i32) {
    %c0_i32 = arith.constant 0 : i32
    %c0_i32_0 = arith.constant 0 : i32
    return %c0_i32, %arg0 : i32, i32
  }
  func.func @transform_4(%arg0: i32) -> (i32, i32, i32) {
    %c0_i32 = arith.constant 0 : i32
    %c0_i32_0 = arith.constant 0 : i32
    %c0_i32_1 = arith.constant 0 : i32
    return %arg0, %c0_i32, %c0_i32_0 : i32, i32, i32
  }
}

module attributes {stable_mosaic.version = 11 : i64} {
  func.func @_bn_relu_conv_stats_kernel(%arg0: i32, %arg1: memref<8x128xf32, #tpu.memory_space<vmem>>, %arg2: memref<8x1xf32, #tpu.memory_space<vmem>>, %arg3: memref<8x1xf32, #tpu.memory_space<vmem>>, %arg4: memref<3x8x8xf32, #tpu.memory_space<vmem>>, %arg5: memref<2x128xf32, #tpu.memory_space<vmem>>, %arg6: memref<1x128xf32, #tpu.memory_space<vmem>>, %arg7: memref<8x128xf32, #tpu.memory_space<vmem>>, %arg8: memref<1x8x2xf32, #tpu.memory_space<vmem>>) attributes {dimension_semantics = [#tpu.dimension_semantics<parallel>], iteration_bounds = array<i64: 2>, scalar_prefetch = 0 : i64, scratch_operands = 0 : i64, tpu.core_type = #tpu.core_type<tc>, window_params = [{transform_indices = @transform_0, window_bounds = array<i64: 8, 128>}, {pipeline_mode = #tpu.pipeline_mode<synchronous>, transform_indices = @transform_1, window_bounds = array<i64: 8, 1>}, {pipeline_mode = #tpu.pipeline_mode<synchronous>, transform_indices = @transform_2, window_bounds = array<i64: 8, 1>}, {pipeline_mode = #tpu.pipeline_mode<synchronous>, transform_indices = @transform_3, window_bounds = array<i64: 3, 8, 8>}, {pipeline_mode = #tpu.pipeline_mode<synchronous>, transform_indices = @transform_4, window_bounds = array<i64: 2, 128>}, {transform_indices = @transform_5, window_bounds = array<i64: 1, 128>}, {transform_indices = @transform_6, window_bounds = array<i64: 8, 128>}, {transform_indices = @transform_7, window_bounds = array<i64: 1, 8, 2>}]} {
    %c0 = arith.constant 0 : index
    %c0_0 = arith.constant 0 : index
    %0 = vector.load %arg1[%c0, %c0_0] : memref<8x128xf32, #tpu.memory_space<vmem>>, vector<8x128xf32>
    %c0_1 = arith.constant 0 : index
    %c0_2 = arith.constant 0 : index
    %1 = vector.load %arg2[%c0_1, %c0_2] : memref<8x1xf32, #tpu.memory_space<vmem>>, vector<8x1xf32>
    %2 = vector.broadcast %1 : vector<8x1xf32> to vector<8x128xf32>
    %3 = arith.mulf %0, %2 : vector<8x128xf32>
    %c0_3 = arith.constant 0 : index
    %c0_4 = arith.constant 0 : index
    %4 = vector.load %arg3[%c0_3, %c0_4] : memref<8x1xf32, #tpu.memory_space<vmem>>, vector<8x1xf32>
    %5 = vector.broadcast %4 : vector<8x1xf32> to vector<8x128xf32>
    %6 = arith.addf %3, %5 : vector<8x128xf32>
    %cst = arith.constant 0.000000e+00 : f32
    %7 = vector.broadcast %cst : f32 to vector<8x128xf32>
    %8 = arith.maximumf %6, %7 : vector<8x128xf32>
    %c0_5 = arith.constant 0 : index
    %c0_6 = arith.constant 0 : index
    %9 = vector.load %arg6[%c0_5, %c0_6] : memref<1x128xf32, #tpu.memory_space<vmem>>, vector<1x128xf32>
    %10 = vector.broadcast %9 : vector<1x128xf32> to vector<8x128xf32>
    %11 = arith.mulf %8, %10 : vector<8x128xf32>
    %c0_7 = arith.constant 0 : index
    %c0_8 = arith.constant 0 : index
    %12 = vector.load %arg5[%c0_7, %c0_8] : memref<2x128xf32, #tpu.memory_space<vmem>>, vector<2x128xf32>
    %c1_i32 = arith.constant 1 : i32
    %13 = tpu.dynamic_rotate %11 by %c1_i32 dim 1 : vector<8x128xf32>, i32 -> vector<8x128xf32>
    %14 = vector.extract_strided_slice %12 {offsets = [0, 0], sizes = [1, 128], strides = [1, 1]} : vector<2x128xf32> to vector<1x128xf32>
    %15 = vector.broadcast %14 : vector<1x128xf32> to vector<8x128xf32>
    %16 = arith.mulf %13, %15 : vector<8x128xf32>
    %c127_i32 = arith.constant 127 : i32
    %17 = tpu.dynamic_rotate %11 by %c127_i32 dim 1 : vector<8x128xf32>, i32 -> vector<8x128xf32>
    %18 = vector.extract_strided_slice %12 {offsets = [1, 0], sizes = [1, 128], strides = [1, 1]} : vector<2x128xf32> to vector<1x128xf32>
    %19 = vector.broadcast %18 : vector<1x128xf32> to vector<8x128xf32>
    %20 = arith.mulf %17, %19 : vector<8x128xf32>
    %c0_9 = arith.constant 0 : index
    %c0_10 = arith.constant 0 : index
    %c0_11 = arith.constant 0 : index
    %21 = vector.load %arg4[%c0_9, %c0_10, %c0_11] : memref<3x8x8xf32, #tpu.memory_space<vmem>>, vector<1x8x8xf32>
    %22 = vector.shape_cast %21 : vector<1x8x8xf32> to vector<8x8xf32>
    %cst_12 = arith.constant dense<0.000000e+00> : vector<8x128xf32>
    %23 = tpu.matmul %22, %16, %cst_12 {dimension_numbers = #tpu.dot_dimension_numbers<[1], [0], [0], [1], [0, 0, 1, 1], [], []>} : vector<8x8xf32>, vector<8x128xf32>, vector<8x128xf32> -> vector<8x128xf32>
    %c1 = arith.constant 1 : index
    %c0_13 = arith.constant 0 : index
    %c0_14 = arith.constant 0 : index
    %24 = vector.load %arg4[%c1, %c0_13, %c0_14] : memref<3x8x8xf32, #tpu.memory_space<vmem>>, vector<1x8x8xf32>
    %25 = vector.shape_cast %24 : vector<1x8x8xf32> to vector<8x8xf32>
    %cst_15 = arith.constant dense<0.000000e+00> : vector<8x128xf32>
    %26 = tpu.matmul %25, %11, %cst_15 {dimension_numbers = #tpu.dot_dimension_numbers<[1], [0], [0], [1], [0, 0, 1, 1], [], []>} : vector<8x8xf32>, vector<8x128xf32>, vector<8x128xf32> -> vector<8x128xf32>
    %27 = arith.addf %23, %26 : vector<8x128xf32>
    %c2 = arith.constant 2 : index
    %c0_16 = arith.constant 0 : index
    %c0_17 = arith.constant 0 : index
    %28 = vector.load %arg4[%c2, %c0_16, %c0_17] : memref<3x8x8xf32, #tpu.memory_space<vmem>>, vector<1x8x8xf32>
    %29 = vector.shape_cast %28 : vector<1x8x8xf32> to vector<8x8xf32>
    %cst_18 = arith.constant dense<0.000000e+00> : vector<8x128xf32>
    %30 = tpu.matmul %29, %20, %cst_18 {dimension_numbers = #tpu.dot_dimension_numbers<[1], [0], [0], [1], [0, 0, 1, 1], [], []>} : vector<8x8xf32>, vector<8x128xf32>, vector<8x128xf32> -> vector<8x128xf32>
    %31 = arith.addf %27, %30 : vector<8x128xf32>
    %cst_19 = arith.constant dense<0.000000e+00> : vector<8xf32>
    %32 = vector.multi_reduction <add>, %31, %cst_19 [1] : vector<8x128xf32> to vector<8xf32>
    %33 = vector.shape_cast %32 : vector<8xf32> to vector<8x1xf32>
    %34 = arith.mulf %31, %31 : vector<8x128xf32>
    %cst_20 = arith.constant dense<0.000000e+00> : vector<8xf32>
    %35 = vector.multi_reduction <add>, %34, %cst_20 [1] : vector<8x128xf32> to vector<8xf32>
    %36 = vector.shape_cast %35 : vector<8xf32> to vector<8x1xf32>
    %37 = tpu.concatenate %33, %36 in 1 : vector<8x1xf32>, vector<8x1xf32> -> vector<8x2xf32>
    %38 = vector.shape_cast %37 : vector<8x2xf32> to vector<1x8x2xf32>
    %c0_21 = arith.constant 0 : index
    %c0_22 = arith.constant 0 : index
    %c0_23 = arith.constant 0 : index
    %39 = vector.load %arg8[%c0_21, %c0_22, %c0_23] : memref<1x8x2xf32, #tpu.memory_space<vmem>>, vector<1x8x2xf32>
    tpu.vector_store %arg8[%c0_21, %c0_22, %c0_23], %38 {strides = array<i32>} : memref<1x8x2xf32, #tpu.memory_space<vmem>>, vector<1x8x2xf32>,
    %c0_24 = arith.constant 0 : index
    %c0_25 = arith.constant 0 : index
    %40 = vector.load %arg7[%c0_24, %c0_25] : memref<8x128xf32, #tpu.memory_space<vmem>>, vector<8x128xf32>
    tpu.vector_store %arg7[%c0_24, %c0_25], %31 {strides = array<i32>} : memref<8x128xf32, #tpu.memory_space<vmem>>, vector<8x128xf32>,
    return
  }
  func.func @transform_0(%arg0: i32) -> (i32, i32) {
    %c0_i32 = arith.constant 0 : i32
    %c0_i32_0 = arith.constant 0 : i32
    return %c0_i32, %arg0 : i32, i32
  }
  func.func @transform_1(%arg0: i32) -> (i32, i32) {
    %c0_i32 = arith.constant 0 : i32
    %c0_i32_0 = arith.constant 0 : i32
    %c0_i32_1 = arith.constant 0 : i32
    return %c0_i32, %c0_i32_0 : i32, i32
  }
  func.func @transform_2(%arg0: i32) -> (i32, i32) {
    %c0_i32 = arith.constant 0 : i32
    %c0_i32_0 = arith.constant 0 : i32
    %c0_i32_1 = arith.constant 0 : i32
    return %c0_i32, %c0_i32_0 : i32, i32
  }
  func.func @transform_3(%arg0: i32) -> (i32, i32, i32) {
    %c0_i32 = arith.constant 0 : i32
    %c0_i32_0 = arith.constant 0 : i32
    %c0_i32_1 = arith.constant 0 : i32
    %c0_i32_2 = arith.constant 0 : i32
    return %c0_i32, %c0_i32_0, %c0_i32_1 : i32, i32, i32
  }
  func.func @transform_4(%arg0: i32) -> (i32, i32) {
    %c0_i32 = arith.constant 0 : i32
    %c0_i32_0 = arith.constant 0 : i32
    %c0_i32_1 = arith.constant 0 : i32
    return %c0_i32, %c0_i32_0 : i32, i32
  }
  func.func @transform_5(%arg0: i32) -> (i32, i32) {
    %c0_i32 = arith.constant 0 : i32
    %c0_i32_0 = arith.constant 0 : i32
    return %c0_i32, %arg0 : i32, i32
  }
  func.func @transform_6(%arg0: i32) -> (i32, i32) {
    %c0_i32 = arith.constant 0 : i32
    %c0_i32_0 = arith.constant 0 : i32
    return %c0_i32, %arg0 : i32, i32
  }
  func.func @transform_7(%arg0: i32) -> (i32, i32, i32) {
    %c0_i32 = arith.constant 0 : i32
    %c0_i32_0 = arith.constant 0 : i32
    %c0_i32_1 = arith.constant 0 : i32
    return %arg0, %c0_i32, %c0_i32_0 : i32, i32, i32
  }
}

</mosaic_0001>

<llo_original>
// kernel: double_conv.2
$region0: #{double_conv.2}
  #allocation0 [shape = 'u32[]', space=smem, size = 0x4, offset = 0x4, fixed_abs, tag = 'smem constant byte address 0x4 - core index']
  #allocation1 [shape = 'u32[72,128]{1,0:T(1,128)}', space=vmem, size = 0x9000, scoped, tag = 'internal scratch']
  %s0 = inlined_call_operand.vmem [shape: f32[8,256], index: 0, kind: input, shape index: {}]
  %s1 = inlined_call_operand.vmem [shape: f32[3,8,8], index: 1, kind: input, shape index: {}]
  %s2 = inlined_call_operand.vmem [shape: f32[2,128], index: 2, kind: input, shape index: {}]
  %s3 = inlined_call_operand.vmem [shape: f32[8,256], index: 3, kind: output, shape index: {0}]
  %s4 = inlined_call_operand.vmem [shape: f32[2,8,2], index: 4, kind: output, shape index: {1}]
  %5 = xla_tuple %s3, %s4
  %s6 = sld [smem:[#allocation0]]
  $region53: #{double_conv.2} parent=0
    _
  %s8 = ssub.s32 1, %s6
  %s9 = scalar_select 0, %s8, %s6
  loop: start=0, step=1, limit=4
  $region2: #{double_conv.2} parent=0 // loop_pre_header
    _
  $region3: #{double_conv.2} parent=0 // loop_header
    %s11 = sphi 0, %s15
    %p12 = scmp.ge.s32.totalorder %s11, 4
    %s21 = sphi 0, %s23
    %s24 = sphi 0, %s21
    %s25 = sphi 0, %s24
    %s41 = sphi 0, %s25
    %s45 = sphi 0, %s45
    %s47 = sphi 0, %s45
    %s48 = sphi 0, %s47
    %s62 = sphi 0, %s48
    %s66 = sphi 0, %s66
    %s68 = sphi 0, %s66
    %s69 = sphi 0, %s68
    %s83 = sphi 0, %s69
    %s89 = sphi 0, %s91
    %s92 = sphi 0, %s89
    %s93 = sphi 0, %s92
    %s109 = sphi 0, %s93
    %s115 = sphi 0, %s117
    %s118 = sphi 0, %s115
    %s119 = sphi 0, %s118
    %s135 = sphi 0, %s119
  $region4: #{double_conv.2} parent=0 // loop_header_branch
    %14 = sbr.rel (%p12) target = $region8
  $region5: #{double_conv.2} parent=0 // loop_body
    %s16 = ssub.s32 %s11, 1
    %s17 = ssub.s32 %s11, 2
    %s18 = sadd.s32 %s11, 1
    %s19 = ssub.s32 %s11, %s18
    %p20 = scmp.eq.s32.totalorder %s19, 0
    %s22 = sadd.s32 %s21, 1
    %s23 = scalar_select %p20, %s21, %s22
    %p26 = pneg %p20
    %p27 = scmp.eq.s32.totalorder %s11, 1
    %p28 = por %p26, %p27
    %p29 = scmp.ne.s32.totalorder %s21, %s24
    %p30 = scmp.eq.s32.totalorder %s11, 0
    %p31 = por %p29, %p30
    %p32 = scmp.ne.s32.totalorder %s21, %s24
    %p33 = scmp.eq.s32.totalorder %s16, 1
    %p34 = por %p32, %p33
    %p35 = scmp.ne.s32.totalorder %s24, %s25
    %p36 = scmp.eq.s32.totalorder %s16, 0
    %p37 = por %p35, %p36
    %p38 = scmp.ne.s32.totalorder %s24, %s25
    %p39 = scmp.eq.s32.totalorder %s17, 1
    %p40 = por %p38, %p39
    %p42 = scmp.ne.s32.totalorder %s25, %s41
    %p43 = scmp.eq.s32.totalorder %s17, 0
    %p44 = por %p42, %p43
    %s46 = sadd.s32 %s45, 1
    %p49 = scmp.eq.s32.totalorder %s11, 1
    %p50 = scmp.ne.s32.totalorder %s45, %s47
    %p51 = scmp.eq.s32.totalorder %s11, 0
    %p52 = por %p50, %p51
    %p53 = scmp.ne.s32.totalorder %s45, %s47
    %p54 = scmp.eq.s32.totalorder %s16, 1
    %p55 = por %p53, %p54
    %p56 = scmp.ne.s32.totalorder %s47, %s48
    %p57 = scmp.eq.s32.totalorder %s16, 0
    %p58 = por %p56, %p57
    %p59 = scmp.ne.s32.totalorder %s47, %s48
    %p60 = scmp.eq.s32.totalorder %s17, 1
    %p61 = por %p59, %p60
    %p63 = scmp.ne.s32.totalorder %s48, %s62
    %p64 = scmp.eq.s32.totalorder %s17, 0
    %p65 = por %p63, %p64
    %s67 = sadd.s32 %s66, 1
    %p70 = scmp.eq.s32.totalorder %s11, 1
    %p71 = scmp.ne.s32.totalorder %s66, %s68
    %p72 = scmp.eq.s32.totalorder %s11, 0
    %p73 = por %p71, %p72
    %p74 = scmp.ne.s32.totalorder %s66, %s68
    %p75 = scmp.eq.s32.totalorder %s16, 1
    %p76 = por %p74, %p75
    %p77 = scmp.ne.s32.totalorder %s68, %s69
    %p78 = scmp.eq.s32.totalorder %s16, 0
    %p79 = por %p77, %p78
    %p80 = scmp.ne.s32.totalorder %s68, %s69
    %p81 = scmp.eq.s32.totalorder %s17, 1
    %p82 = por %p80, %p81
    %p84 = scmp.ne.s32.totalorder %s69, %s83
    %p85 = scmp.eq.s32.totalorder %s17, 0
    %p86 = por %p84, %p85
    %s87 = ssub.s32 %s11, %s18
    %p88 = scmp.eq.s32.totalorder %s87, 0
    %s90 = sadd.s32 %s89, 1
    %s91 = scalar_select %p88, %s89, %s90
    %p94 = pneg %p88
    %p95 = scmp.eq.s32.totalorder %s11, 1
    %p96 = por %p94, %p95
    %p97 = scmp.ne.s32.totalorder %s89, %s92
    %p98 = scmp.eq.s32.totalorder %s11, 0
    %p99 = por %p97, %p98
    %p100 = scmp.ne.s32.totalorder %s89, %s92
    %p101 = scmp.eq.s32.totalorder %s16, 1
    %p102 = por %p100, %p101
    %p103 = scmp.ne.s32.totalorder %s92, %s93
    %p104 = scmp.eq.s32.totalorder %s16, 0
    %p105 = por %p103, %p104
    %p106 = scmp.ne.s32.totalorder %s92, %s93
    %p107 = scmp.eq.s32.totalorder %s17, 1
    %p108 = por %p106, %p107
    %p110 = scmp.ne.s32.totalorder %s93, %s109
    %p111 = scmp.eq.s32.totalorder %s17, 0
    %p112 = por %p110, %p111
    %s113 = ssub.s32 %s11, %s18
    %p114 = scmp.eq.s32.totalorder %s113, 0
    %s116 = sadd.s32 %s115, 1
    %s117 = scalar_select %p114, %s115, %s116
    %p120 = pneg %p114
    %p121 = scmp.eq.s32.totalorder %s11, 1
    %p122 = por %p120, %p121
    %p123 = scmp.ne.s32.totalorder %s115, %s118
    %p124 = scmp.eq.s32.totalorder %s11, 0
    %p125 = por %p123, %p124
    %p126 = scmp.ne.s32.totalorder %s115, %s118
    %p127 = scmp.eq.s32.totalorder %s16, 1
    %p128 = por %p126, %p127
    %p129 = scmp.ne.s32.totalorder %s118, %s119
    %p130 = scmp.eq.s32.totalorder %s16, 0
    %p131 = por %p129, %p130
    %p132 = scmp.ne.s32.totalorder %s118, %s119
    %p133 = scmp.eq.s32.totalorder %s17, 1
    %p134 = por %p132, %p133
    %p136 = scmp.ne.s32.totalorder %s119, %s135
    %p137 = scmp.eq.s32.totalorder %s17, 0
    %p138 = por %p136, %p137
    %p139 = scmp.le.s32.totalorder 1, %s11
    %p140 = scmp.lt.s32.totalorder %s11, 3
    %p141 = pnand %p139, %p140
    %p142 = pneg %p141
    // Predicated region
    $region9: #{double_conv.2} parent=5 // pred_check
      _
    $region10: #{double_conv.2} parent=5 // pred_check_branch
      %144 = sbr.rel (%p141) target = $region12
    $region11: #{double_conv.2} parent=5 // pred_region
      %s145 = ssub.s32 %s11, 1
      // Predicated region
      $region13: #{double_conv.2} parent=11 // pred_check
        %p146 = pneg %p58
      $region14: #{double_conv.2} parent=11 // pred_check_branch
        %148 = sbr.rel (%p146) target = $region16
      $region15: #{double_conv.2} parent=11 // pred_region
        _
      $region16: #{double_conv.2} parent=11 // pred_fallthru
        _
      // Predicated region
      $region17: #{double_conv.2} parent=11 // pred_check
        %p149 = pneg %p79
      $region18: #{double_conv.2} parent=11 // pred_check_branch
        %151 = sbr.rel (%p149) target = $region20
      $region19: #{double_conv.2} parent=11 // pred_region
        _
      $region20: #{double_conv.2} parent=11 // pred_fallthru
        _
    $region12: #{double_conv.2} parent=5 // pred_fallthru
      _
    %p152 = scmp.lt.s32.totalorder %s11, 2
    // Predicated region
    $region21: #{double_conv.2} parent=5 // pred_check
      %p153 = pneg %p152
    $region22: #{double_conv.2} parent=5 // pred_check_branch
      %155 = sbr.rel (%p153) target = $region24
    $region23: #{double_conv.2} parent=5 // pred_region
      // Predicated region
      $region25: #{double_conv.2} parent=23 // pred_check
        %p156 = pneg %p31
      $region26: #{double_conv.2} parent=23 // pred_check_branch
        %158 = sbr.rel (%p156) target = $region28
      $region27: #{double_conv.2} parent=23 // pred_region
        %p159 = scmp.lt.s32.totalorder %s11, 1
        %s160 = scalar_select %p159, %s11, 1
        %s161 = smul.addr %s160, 8
        %s162 = scalar_lea.vmem %s0, %s161
      $region28: #{double_conv.2} parent=23 // pred_fallthru
        _
    $region24: #{double_conv.2} parent=5 // pred_fallthru
      _
    %p163 = scmp.le.s32.totalorder 1, %s11
    %p164 = scmp.lt.s32.totalorder %s11, 3
    %p165 = pnand %p163, %p164
    %p166 = pneg %p165
    // Predicated region
    $region29: #{double_conv.2} parent=5 // pred_check
      _
    $region30: #{double_conv.2} parent=5 // pred_check_branch
      %168 = sbr.rel (%p165) target = $region32
    $region31: #{double_conv.2} parent=5 // pred_region
      %s169 = ssub.s32 %s11, 1
      %p170 = scmp.lt.s32.totalorder %s16, 1
      %s171 = scalar_select %p170, %s16, 1
      %s172 = smul.addr %s171, 8
      %s173 = scalar_lea.vmem %s0, %s172
      %p174 = pneg %p37
      %p175 = pneg %p34
      %p176 = pneg %p58
      %p177 = pneg %p55
      %p178 = pneg %p79
      %p179 = pneg %p76
      %p180 = pneg %p105
      %p181 = pneg %p102
      %p182 = scmp.lt.s32.totalorder %s16, 1
      %s183 = scalar_select %p182, %s16, 1
      %s184 = smul.addr %s183, 8
      %s185 = scalar_lea.vmem %s3, %s184
      %p186 = pneg %p131
      %p187 = pneg %p128
      %p188 = scmp.lt.s32.totalorder %s16, 1
      %s189 = scalar_select %p188, %s16, 1
      %s190 = smul.addr %s189, 8
      %s191 = scalar_lea.vmem %s4, %s190
      %p192 = scmp.lt.s32.totalorder %s16, 1
      %s193 = scalar_select %p192, %s16, 1
      %s194 = smul.addr %s193, 8
      %s195 = scalar_lea.vmem %s0, %s194
      %p196 = scmp.lt.s32.totalorder %s16, 1
      %s197 = scalar_select %p196, %s16, 1
      %s198 = smul.addr %s197, 8
      %s199 = scalar_lea.vmem %s3, %s198
      %p200 = scmp.lt.s32.totalorder %s16, 1
      %s201 = scalar_select %p200, %s16, 1
      %s202 = smul.addr %s201, 8
      %s203 = scalar_lea.vmem %s4, %s202
      %v204 = vld [vmem:[%s195] sm:$0xff]
      %v205 = vld [vmem:[%s2] sm:$0x3]
      %206 = vrot.lane.b32.xlu0 %v204, 1
      %v207 = vpop.permute.xlu0 %206
      %v208 = vperm.slane %v205, 0
      %v209 = vmul.f32 %v207, %v208
      %210 = vrot.lane.b32.xlu0 %v204, 127
      %v211 = vpop.permute.xlu0 %210
      %v212 = vperm.slane %v205, 1
      %v213 = vmul.f32 %v211, %v212
      %v214 = vld [vmem:[%s1] sm:$0xff]
      %s215 = scalar_lea.vmem %s1, 8
      %v216 = vld [vmem:[%s215] sm:$0xff]
      %vm217 = vcmask 64512
      %v219 = vsel %vm217, %v216, 0
      %221 = vmatpush.msra.mxu0 0.0
      %222 = vmatpush.msra.mxu0 0.0
      %223 = vmatpush.msra.mxu0 0.0
      %224 = vmatpush.msra.mxu0 0.0
      %225 = vmatpush.msra.mxu0 0.0
      %226 = vmatpush.msra.mxu0 0.0
      %227 = vmatpush.msra.mxu0 0.0
      %228 = vmatpush.msra.mxu0 0.0
      %229 = vmatpush.msra.mxu0 0.0
      %230 = vmatpush.msra.mxu0 0.0
      %231 = vmatpush.msra.mxu0 0.0
      %232 = vmatpush.msra.mxu0 0.0
      %233 = vmatpush.msra.mxu0 0.0
      %234 = vmatpush.msra.mxu0 0.0
      %235 = vmatpush.msra.mxu0 0.0
      %236 = vmatpush.msra.mxu0 %v204
      %237 = vmatmul.f32.gmra.mxu0 %v219
      %v238 = vpop.f32.mrf.mxu0
      %v239 = vadd.f32 0.0, %v238
      %240 = vdwg.mxu0
      %v242 = vsel %vm217, %v214, 0
      %244 = vmatpush.msra.mxu0 0.0
      %245 = vmatpush.msra.mxu0 0.0
      %246 = vmatpush.msra.mxu0 0.0
      %247 = vmatpush.msra.mxu0 0.0
      %248 = vmatpush.msra.mxu0 0.0
      %249 = vmatpush.msra.mxu0 0.0
      %250 = vmatpush.msra.mxu0 0.0
      %251 = vmatpush.msra.mxu0 0.0
      %252 = vmatpush.msra.mxu0 0.0
      %253 = vmatpush.msra.mxu0 0.0
      %254 = vmatpush.msra.mxu0 0.0
      %255 = vmatpush.msra.mxu0 0.0
      %256 = vmatpush.msra.mxu0 0.0
      %257 = vmatpush.msra.mxu0 0.0
      %258 = vmatpush.msra.mxu0 0.0
      %259 = vmatpush.msra.mxu0 %v209
      %260 = vmatmul.f32.gmra.mxu0 %v242
      %v261 = vpop.f32.mrf.mxu0
      %v262 = vadd.f32 %v239, %v261
      %263 = vdwg.mxu0
      %s264 = scalar_lea.vmem %s1, 16
      %v265 = vld [vmem:[%s264] sm:$0xff]
      %v267 = vsel %vm217, %v265, 0
      %269 = vmatpush.msra.mxu0 0.0
      %270 = vmatpush.msra.mxu0 0.0
      %271 = vmatpush.msra.mxu0 0.0
      %272 = vmatpush.msra.mxu0 0.0
      %273 = vmatpush.msra.mxu0 0.0
      %274 = vmatpush.msra.mxu0 0.0
      %275 = vmatpush.msra.mxu0 0.0
      %276 = vmatpush.msra.mxu0 0.0
      %277 = vmatpush.msra.mxu0 0.0
      %278 = vmatpush.msra.mxu0 0.0
      %279 = vmatpush.msra.mxu0 0.0
      %280 = vmatpush.msra.mxu0 0.0
      %281 = vmatpush.msra.mxu0 0.0
      %282 = vmatpush.msra.mxu0 0.0
      %283 = vmatpush.msra.mxu0 0.0
      %284 = vmatpush.msra.mxu0 %v213
      %285 = vmatmul.f32.gmra.mxu0 %v267
      %v286 = vpop.f32.mrf.mxu0
      %v287 = vadd.f32 0.0, %v286
      %288 = vdwg.mxu0
      %v289 = vadd.f32 %v262, %v287
      %290 = vadd.xlane.f32.xlu0 %v289
      %v291 = vpop.xlane.xlu0 %290
      %v292 = vmul.f32 %v289, %v289
      %293 = vadd.xlane.f32.xlu0 %v292
      %v294 = vpop.xlane.xlu0 %293
      %vm295 = vcmask 7168
      %v296 = vsel %vm295, %v291, %v294
      %vm297 = vcmask 15360
      %298 = vst.msk [vmem:[%s203] sm:$0xff] %vm297, %v296
      %299 = vst [vmem:[%s199] sm:$0xff] %v289
      %p300 = scmp.lt.s32.totalorder %s16, 1
      %s301 = scalar_select %p300, %s16, 1
      %s302 = smul.addr %s301, 8
      %s303 = scalar_lea.vmem %s3, %s302
      %p304 = scmp.lt.s32.totalorder %s16, 1
      %s305 = scalar_select %p304, %s16, 1
      %s306 = smul.addr %s305, 8
      %s307 = scalar_lea.vmem %s4, %s306
      // Predicated region
      $region33: #{double_conv.2} parent=31 // pred_check
        %p308 = pneg %p102
      $region34: #{double_conv.2} parent=31 // pred_check_branch
        %310 = sbr.rel (%p308) target = $region36
      $region35: #{double_conv.2} parent=31 // pred_region
        _
      $region36: #{double_conv.2} parent=31 // pred_fallthru
        _
      // Predicated region
      $region37: #{double_conv.2} parent=31 // pred_check
        %p311 = pneg %p128
      $region38: #{double_conv.2} parent=31 // pred_check_branch
        %313 = sbr.rel (%p311) target = $region40
      $region39: #{double_conv.2} parent=31 // pred_region
        _
      $region40: #{double_conv.2} parent=31 // pred_fallthru
        _
    $region32: #{double_conv.2} parent=5 // pred_fallthru
      _
    %p314 = scmp.le.s32.totalorder 2, %s11
    // Predicated region
    $region41: #{double_conv.2} parent=5 // pred_check
      %p315 = pneg %p314
    $region42: #{double_conv.2} parent=5 // pred_check_branch
      %317 = sbr.rel (%p315) target = $region44
    $region43: #{double_conv.2} parent=5 // pred_region
      %s318 = ssub.s32 %s11, 2
      // Predicated region
      $region45: #{double_conv.2} parent=43 // pred_check
        %p319 = pneg %p108
      $region46: #{double_conv.2} parent=43 // pred_check_branch
        %321 = sbr.rel (%p319) target = $region48
      $region47: #{double_conv.2} parent=43 // pred_region
        %p322 = scmp.lt.s32.totalorder %s17, 1
        %s323 = scalar_select %p322, %s17, 1
        %s324 = smul.addr %s323, 8
        %s325 = scalar_lea.vmem %s3, %s324
      $region48: #{double_conv.2} parent=43 // pred_fallthru
        _
      // Predicated region
      $region49: #{double_conv.2} parent=43 // pred_check
        %p326 = pneg %p134
      $region50: #{double_conv.2} parent=43 // pred_check_branch
        %328 = sbr.rel (%p326) target = $region52
      $region51: #{double_conv.2} parent=43 // pred_region
        %p329 = scmp.lt.s32.totalorder %s17, 1
        %s330 = scalar_select %p329, %s17, 1
        %s331 = smul.addr %s330, 8
        %s332 = scalar_lea.vmem %s4, %s331
      $region52: #{double_conv.2} parent=43 // pred_fallthru
        _
    $region44: #{double_conv.2} parent=5 // pred_fallthru
      _
  $region6: #{double_conv.2} parent=0 // loop_footer
    %s15 = sadd.s32 1, %s11
  $region7: #{double_conv.2} parent=0 // loop_footer_branch
    %10 = sbr.rel target = $region3
  $region8: #{double_conv.2} parent=0 // loop_exit
    _

// kernel: double_conv.3
$region0: #{double_conv.3}
  #allocation0 [shape = 'u32[]', space=smem, size = 0x4, offset = 0x4, fixed_abs, tag = 'smem constant byte address 0x4 - core index']
  #allocation1 [shape = 'u32[72,128]{1,0:T(1,128)}', space=vmem, size = 0x9000, scoped, tag = 'internal scratch']
  %s0 = inlined_call_operand.vmem [shape: f32[8,256], index: 0, kind: input, shape index: {}]
  %s1 = inlined_call_operand.vmem [shape: f32[8,1], index: 1, kind: input, shape index: {}]
  %s2 = inlined_call_operand.vmem [shape: f32[8,1], index: 2, kind: input, shape index: {}]
  %s3 = inlined_call_operand.vmem [shape: f32[3,8,8], index: 3, kind: input, shape index: {}]
  %s4 = inlined_call_operand.vmem [shape: f32[2,128], index: 4, kind: input, shape index: {}]
  %s5 = inlined_call_operand.vmem [shape: f32[1,256], index: 5, kind: input, shape index: {}]
  %s6 = inlined_call_operand.vmem [shape: f32[8,256], index: 6, kind: output, shape index: {0}]
  %s7 = inlined_call_operand.vmem [shape: f32[2,8,2], index: 7, kind: output, shape index: {1}]
  %8 = xla_tuple %s6, %s7
  %s9 = sld [smem:[#allocation0]]
  $region65: #{double_conv.3} parent=0
    _
  %s11 = ssub.s32 1, %s9
  %s12 = scalar_select 0, %s11, %s9
  loop: start=0, step=1, limit=4
  $region2: #{double_conv.3} parent=0 // loop_pre_header
    _
  $region3: #{double_conv.3} parent=0 // loop_header
    %s14 = sphi 0, %s18
    %p15 = scmp.ge.s32.totalorder %s14, 4
    %s24 = sphi 0, %s26
    %s27 = sphi 0, %s24
    %s28 = sphi 0, %s27
    %s44 = sphi 0, %s28
    %s48 = sphi 0, %s48
    %s50 = sphi 0, %s48
    %s51 = sphi 0, %s50
    %s65 = sphi 0, %s51
    %s69 = sphi 0, %s69
    %s71 = sphi 0, %s69
    %s72 = sphi 0, %s71
    %s86 = sphi 0, %s72
    %s90 = sphi 0, %s90
    %s92 = sphi 0, %s90
    %s93 = sphi 0, %s92
    %s107 = sphi 0, %s93
    %s111 = sphi 0, %s111
    %s113 = sphi 0, %s111
    %s114 = sphi 0, %s113
    %s128 = sphi 0, %s114
    %s134 = sphi 0, %s136
    %s137 = sphi 0, %s134
    %s138 = sphi 0, %s137
    %s154 = sphi 0, %s138
    %s160 = sphi 0, %s162
    %s163 = sphi 0, %s160
    %s164 = sphi 0, %s163
    %s180 = sphi 0, %s164
    %s186 = sphi 0, %s188
    %s189 = sphi 0, %s186
    %s190 = sphi 0, %s189
    %s206 = sphi 0, %s190
  $region4: #{double_conv.3} parent=0 // loop_header_branch
    %17 = sbr.rel (%p15) target = $region8
  $region5: #{double_conv.3} parent=0 // loop_body
    %s19 = ssub.s32 %s14, 1
    %s20 = ssub.s32 %s14, 2
    %s21 = sadd.s32 %s14, 1
    %s22 = ssub.s32 %s14, %s21
    %p23 = scmp.eq.s32.totalorder %s22, 0
    %s25 = sadd.s32 %s24, 1
    %s26 = scalar_select %p23, %s24, %s25
    %p29 = pneg %p23
    %p30 = scmp.eq.s32.totalorder %s14, 1
    %p31 = por %p29, %p30
    %p32 = scmp.ne.s32.totalorder %s24, %s27
    %p33 = scmp.eq.s32.totalorder %s14, 0
    %p34 = por %p32, %p33
    %p35 = scmp.ne.s32.totalorder %s24, %s27
    %p36 = scmp.eq.s32.totalorder %s19, 1
    %p37 = por %p35, %p36
    %p38 = scmp.ne.s32.totalorder %s27, %s28
    %p39 = scmp.eq.s32.totalorder %s19, 0
    %p40 = por %p38, %p39
    %p41 = scmp.ne.s32.totalorder %s27, %s28
    %p42 = scmp.eq.s32.totalorder %s20, 1
    %p43 = por %p41, %p42
    %p45 = scmp.ne.s32.totalorder %s28, %s44
    %p46 = scmp.eq.s32.totalorder %s20, 0
    %p47 = por %p45, %p46
    %s49 = sadd.s32 %s48, 1
    %p52 = scmp.eq.s32.totalorder %s14, 1
    %p53 = scmp.ne.s32.totalorder %s48, %s50
    %p54 = scmp.eq.s32.totalorder %s14, 0
    %p55 = por %p53, %p54
    %p56 = scmp.ne.s32.totalorder %s48, %s50
    %p57 = scmp.eq.s32.totalorder %s19, 1
    %p58 = por %p56, %p57
    %p59 = scmp.ne.s32.totalorder %s50, %s51
    %p60 = scmp.eq.s32.totalorder %s19, 0
    %p61 = por %p59, %p60
    %p62 = scmp.ne.s32.totalorder %s50, %s51
    %p63 = scmp.eq.s32.totalorder %s20, 1
    %p64 = por %p62, %p63
    %p66 = scmp.ne.s32.totalorder %s51, %s65
    %p67 = scmp.eq.s32.totalorder %s20, 0
    %p68 = por %p66, %p67
    %s70 = sadd.s32 %s69, 1
    %p73 = scmp.eq.s32.totalorder %s14, 1
    %p74 = scmp.ne.s32.totalorder %s69, %s71
    %p75 = scmp.eq.s32.totalorder %s14, 0
    %p76 = por %p74, %p75
    %p77 = scmp.ne.s32.totalorder %s69, %s71
    %p78 = scmp.eq.s32.totalorder %s19, 1
    %p79 = por %p77, %p78
    %p80 = scmp.ne.s32.totalorder %s71, %s72
    %p81 = scmp.eq.s32.totalorder %s19, 0
    %p82 = por %p80, %p81
    %p83 = scmp.ne.s32.totalorder %s71, %s72
    %p84 = scmp.eq.s32.totalorder %s20, 1
    %p85 = por %p83, %p84
    %p87 = scmp.ne.s32.totalorder %s72, %s86
    %p88 = scmp.eq.s32.totalorder %s20, 0
    %p89 = por %p87, %p88
    %s91 = sadd.s32 %s90, 1
    %p94 = scmp.eq.s32.totalorder %s14, 1
    %p95 = scmp.ne.s32.totalorder %s90, %s92
    %p96 = scmp.eq.s32.totalorder %s14, 0
    %p97 = por %p95, %p96
    %p98 = scmp.ne.s32.totalorder %s90, %s92
    %p99 = scmp.eq.s32.totalorder %s19, 1
    %p100 = por %p98, %p99
    %p101 = scmp.ne.s32.totalorder %s92, %s93
    %p102 = scmp.eq.s32.totalorder %s19, 0
    %p103 = por %p101, %p102
    %p104 = scmp.ne.s32.totalorder %s92, %s93
    %p105 = scmp.eq.s32.totalorder %s20, 1
    %p106 = por %p104, %p105
    %p108 = scmp.ne.s32.totalorder %s93, %s107
    %p109 = scmp.eq.s32.totalorder %s20, 0
    %p110 = por %p108, %p109
    %s112 = sadd.s32 %s111, 1
    %p115 = scmp.eq.s32.totalorder %s14, 1
    %p116 = scmp.ne.s32.totalorder %s111, %s113
    %p117 = scmp.eq.s32.totalorder %s14, 0
    %p118 = por %p116, %p117
    %p119 = scmp.ne.s32.totalorder %s111, %s113
    %p120 = scmp.eq.s32.totalorder %s19, 1
    %p121 = por %p119, %p120
    %p122 = scmp.ne.s32.totalorder %s113, %s114
    %p123 = scmp.eq.s32.totalorder %s19, 0
    %p124 = por %p122, %p123
    %p125 = scmp.ne.s32.totalorder %s113, %s114
    %p126 = scmp.eq.s32.totalorder %s20, 1
    %p127 = por %p125, %p126
    %p129 = scmp.ne.s32.totalorder %s114, %s128
    %p130 = scmp.eq.s32.totalorder %s20, 0
    %p131 = por %p129, %p130
    %s132 = ssub.s32 %s14, %s21
    %p133 = scmp.eq.s32.totalorder %s132, 0
    %s135 = sadd.s32 %s134, 1
    %s136 = scalar_select %p133, %s134, %s135
    %p139 = pneg %p133
    %p140 = scmp.eq.s32.totalorder %s14, 1
    %p141 = por %p139, %p140
    %p142 = scmp.ne.s32.totalorder %s134, %s137
    %p143 = scmp.eq.s32.totalorder %s14, 0
    %p144 = por %p142, %p143
    %p145 = scmp.ne.s32.totalorder %s134, %s137
    %p146 = scmp.eq.s32.totalorder %s19, 1
    %p147 = por %p145, %p146
    %p148 = scmp.ne.s32.totalorder %s137, %s138
    %p149 = scmp.eq.s32.totalorder %s19, 0
    %p150 = por %p148, %p149
    %p151 = scmp.ne.s32.totalorder %s137, %s138
    %p152 = scmp.eq.s32.totalorder %s20, 1
    %p153 = por %p151, %p152
    %p155 = scmp.ne.s32.totalorder %s138, %s154
    %p156 = scmp.eq.s32.totalorder %s20, 0
    %p157 = por %p155, %p156
    %s158 = ssub.s32 %s14, %s21
    %p159 = scmp.eq.s32.totalorder %s158, 0
    %s161 = sadd.s32 %s160, 1
    %s162 = scalar_select %p159, %s160, %s161
    %p165 = pneg %p159
    %p166 = scmp.eq.s32.totalorder %s14, 1
    %p167 = por %p165, %p166
    %p168 = scmp.ne.s32.totalorder %s160, %s163
    %p169 = scmp.eq.s32.totalorder %s14, 0
    %p170 = por %p168, %p169
    %p171 = scmp.ne.s32.totalorder %s160, %s163
    %p172 = scmp.eq.s32.totalorder %s19, 1
    %p173 = por %p171, %p172
    %p174 = scmp.ne.s32.totalorder %s163, %s164
    %p175 = scmp.eq.s32.totalorder %s19, 0
    %p176 = por %p174, %p175
    %p177 = scmp.ne.s32.totalorder %s163, %s164
    %p178 = scmp.eq.s32.totalorder %s20, 1
    %p179 = por %p177, %p178
    %p181 = scmp.ne.s32.totalorder %s164, %s180
    %p182 = scmp.eq.s32.totalorder %s20, 0
    %p183 = por %p181, %p182
    %s184 = ssub.s32 %s14, %s21
    %p185 = scmp.eq.s32.totalorder %s184, 0
    %s187 = sadd.s32 %s186, 1
    %s188 = scalar_select %p185, %s186, %s187
    %p191 = pneg %p185
    %p192 = scmp.eq.s32.totalorder %s14, 1
    %p193 = por %p191, %p192
    %p194 = scmp.ne.s32.totalorder %s186, %s189
    %p195 = scmp.eq.s32.totalorder %s14, 0
    %p196 = por %p194, %p195
    %p197 = scmp.ne.s32.totalorder %s186, %s189
    %p198 = scmp.eq.s32.totalorder %s19, 1
    %p199 = por %p197, %p198
    %p200 = scmp.ne.s32.totalorder %s189, %s190
    %p201 = scmp.eq.s32.totalorder %s19, 0
    %p202 = por %p200, %p201
    %p203 = scmp.ne.s32.totalorder %s189, %s190
    %p204 = scmp.eq.s32.totalorder %s20, 1
    %p205 = por %p203, %p204
    %p207 = scmp.ne.s32.totalorder %s190, %s206
    %p208 = scmp.eq.s32.totalorder %s20, 0
    %p209 = por %p207, %p208
    %p210 = scmp.le.s32.totalorder 1, %s14
    %p211 = scmp.lt.s32.totalorder %s14, 3
    %p212 = pnand %p210, %p211
    %p213 = pneg %p212
    // Predicated region
    $region9: #{double_conv.3} parent=5 // pred_check
      _
    $region10: #{double_conv.3} parent=5 // pred_check_branch
      %215 = sbr.rel (%p212) target = $region12
    $region11: #{double_conv.3} parent=5 // pred_region
      %s216 = ssub.s32 %s14, 1
      // Predicated region
      $region13: #{double_conv.3} parent=11 // pred_check
        %p217 = pneg %p61
      $region14: #{double_conv.3} parent=11 // pred_check_branch
        %219 = sbr.rel (%p217) target = $region16
      $region15: #{double_conv.3} parent=11 // pred_region
        _
      $region16: #{double_conv.3} parent=11 // pred_fallthru
        _
      // Predicated region
      $region17: #{double_conv.3} parent=11 // pred_check
        %p220 = pneg %p82
      $region18: #{double_conv.3} parent=11 // pred_check_branch
        %222 = sbr.rel (%p220) target = $region20
      $region19: #{double_conv.3} parent=11 // pred_region
        _
      $region20: #{double_conv.3} parent=11 // pred_fallthru
        _
      // Predicated region
      $region21: #{double_conv.3} parent=11 // pred_check
        %p223 = pneg %p103
      $region22: #{double_conv.3} parent=11 // pred_check_branch
        %225 = sbr.rel (%p223) target = $region24
      $region23: #{double_conv.3} parent=11 // pred_region
        _
      $region24: #{double_conv.3} parent=11 // pred_fallthru
        _
      // Predicated region
      $region25: #{double_conv.3} parent=11 // pred_check
        %p226 = pneg %p124
      $region26: #{double_conv.3} parent=11 // pred_check_branch
        %228 = sbr.rel (%p226) target = $region28
      $region27: #{double_conv.3} parent=11 // pred_region
        _
      $region28: #{double_conv.3} parent=11 // pred_fallthru
        _
    $region12: #{double_conv.3} parent=5 // pred_fallthru
      _
    %p229 = scmp.lt.s32.totalorder %s14, 2
    // Predicated region
    $region29: #{double_conv.3} parent=5 // pred_check
      %p230 = pneg %p229
    $region30: #{double_conv.3} parent=5 // pred_check_branch
      %232 = sbr.rel (%p230) target = $region32
    $region31: #{double_conv.3} parent=5 // pred_region
      // Predicated region
      $region33: #{double_conv.3} parent=31 // pred_check
        %p233 = pneg %p34
      $region34: #{double_conv.3} parent=31 // pred_check_branch
        %235 = sbr.rel (%p233) target = $region36
      $region35: #{double_conv.3} parent=31 // pred_region
        %p236 = scmp.lt.s32.totalorder %s14, 1
        %s237 = scalar_select %p236, %s14, 1
        %s238 = smul.addr %s237, 8
        %s239 = scalar_lea.vmem %s0, %s238
      $region36: #{double_conv.3} parent=31 // pred_fallthru
        _
      // Predicated region
      $region37: #{double_conv.3} parent=31 // pred_check
        %p240 = pneg %p144
      $region38: #{double_conv.3} parent=31 // pred_check_branch
        %242 = sbr.rel (%p240) target = $region40
      $region39: #{double_conv.3} parent=31 // pred_region
        %p243 = scmp.lt.s32.totalorder %s14, 1
        %s244 = scalar_select %p243, %s14, 1
        %s245 = scalar_lea.vmem %s5, %s244
      $region40: #{double_conv.3} parent=31 // pred_fallthru
        _
    $region32: #{double_conv.3} parent=5 // pred_fallthru
      _
    %p246 = scmp.le.s32.totalorder 1, %s14
    %p247 = scmp.lt.s32.totalorder %s14, 3
    %p248 = pnand %p246, %p247
    %p249 = pneg %p248
    // Predicated region
    $region41: #{double_conv.3} parent=5 // pred_check
      _
    $region42: #{double_conv.3} parent=5 // pred_check_branch
      %251 = sbr.rel (%p248) target = $region44
    $region43: #{double_conv.3} parent=5 // pred_region
      %s252 = ssub.s32 %s14, 1
      %p253 = scmp.lt.s32.totalorder %s19, 1
      %s254 = scalar_select %p253, %s19, 1
      %s255 = smul.addr %s254, 8
      %s256 = scalar_lea.vmem %s0, %s255
      %p257 = pneg %p40
      %p258 = pneg %p37
      %p259 = pneg %p61
      %p260 = pneg %p58
      %p261 = pneg %p82
      %p262 = pneg %p79
      %p263 = pneg %p103
      %p264 = pneg %p100
      %p265 = pneg %p124
      %p266 = pneg %p121
      %p267 = scmp.lt.s32.totalorder %s19, 1
      %s268 = scalar_select %p267, %s19, 1
      %s269 = scalar_lea.vmem %s5, %s268
      %p270 = pneg %p150
      %p271 = pneg %p147
      %p272 = pneg %p176
      %p273 = pneg %p173
      %p274 = scmp.lt.s32.totalorder %s19, 1
      %s275 = scalar_select %p274, %s19, 1
      %s276 = smul.addr %s275, 8
      %s277 = scalar_lea.vmem %s6, %s276
      %p278 = pneg %p202
      %p279 = pneg %p199
      %p280 = scmp.lt.s32.totalorder %s19, 1
      %s281 = scalar_select %p280, %s19, 1
      %s282 = smul.addr %s281, 8
      %s283 = scalar_lea.vmem %s7, %s282
      %p284 = scmp.lt.s32.totalorder %s19, 1
      %s285 = scalar_select %p284, %s19, 1
      %s286 = smul.addr %s285, 8
      %s287 = scalar_lea.vmem %s0, %s286
      %p288 = scmp.lt.s32.totalorder %s19, 1
      %s289 = scalar_select %p288, %s19, 1
      %s290 = scalar_lea.vmem %s5, %s289
      %p291 = scmp.lt.s32.totalorder %s19, 1
      %s292 = scalar_select %p291, %s19, 1
      %s293 = smul.addr %s292, 8
      %s294 = scalar_lea.vmem %s6, %s293
      %p295 = scmp.lt.s32.totalorder %s19, 1
      %s296 = scalar_select %p295, %s19, 1
      %s297 = smul.addr %s296, 8
      %s298 = scalar_lea.vmem %s7, %s297
      %v299 = vld [vmem:[%s287] sm:$0xff]
      %v300 = vld [vmem:[%s1] sm:$0xff]
      %302 = vset.pattern.permute.xlu0 0
      %303 = vperm.xlu0 %302, %v300
      %v304 = vpop.permute.xlu0 %303
      %v306 = vmul.f32 %v299, %v304
      %v307 = vld [vmem:[%s2] sm:$0xff]
      %309 = vset.pattern.permute.xlu0 0
      %310 = vperm.xlu0 %309, %v307
      %v311 = vpop.permute.xlu0 %310
      %v313 = vadd.f32 %v306, %v311
      %v314 = vmax.f32 %v313, 0.0
      %v315 = vld [vmem:[%s290] sm:$0x1]
      %v317 = vperm.slane %v315, 0
      %v319 = vmul.f32 %v314, %v317
      %v320 = vld [vmem:[%s4] sm:$0x3]
      %321 = vrot.lane.b32.xlu0 %v319, 1
      %v322 = vpop.permute.xlu0 %321
      %v323 = vperm.slane %v320, 0
      %v324 = vmul.f32 %v322, %v323
      %325 = vrot.lane.b32.xlu0 %v319, 127
      %v326 = vpop.permute.xlu0 %325
      %v327 = vperm.slane %v320, 1
      %v328 = vmul.f32 %v326, %v327
      %v329 = vld [vmem:[%s3] sm:$0xff]
      %s330 = scalar_lea.vmem %s3, 8
      %v331 = vld [vmem:[%s330] sm:$0xff]
      %vm332 = vcmask 64512
      %v334 = vsel %vm332, %v331, 0
      %336 = vmatpush.msra.mxu0 0.0
      %337 = vmatpush.msra.mxu0 0.0
      %338 = vmatpush.msra.mxu0 0.0
      %339 = vmatpush.msra.mxu0 0.0
      %340 = vmatpush.msra.mxu0 0.0
      %341 = vmatpush.msra.mxu0 0.0
      %342 = vmatpush.msra.mxu0 0.0
      %343 = vmatpush.msra.mxu0 0.0
      %344 = vmatpush.msra.mxu0 0.0
      %345 = vmatpush.msra.mxu0 0.0
      %346 = vmatpush.msra.mxu0 0.0
      %347 = vmatpush.msra.mxu0 0.0
      %348 = vmatpush.msra.mxu0 0.0
      %349 = vmatpush.msra.mxu0 0.0
      %350 = vmatpush.msra.mxu0 0.0
      %351 = vmatpush.msra.mxu0 %v319
      %352 = vmatmul.f32.gmra.mxu0 %v334
      %v353 = vpop.f32.mrf.mxu0
      %v354 = vadd.f32 0.0, %v353
      %355 = vdwg.mxu0
      %v357 = vsel %vm332, %v329, 0
      %359 = vmatpush.msra.mxu0 0.0
      %360 = vmatpush.msra.mxu0 0.0
      %361 = vmatpush.msra.mxu0 0.0
      %362 = vmatpush.msra.mxu0 0.0
      %363 = vmatpush.msra.mxu0 0.0
      %364 = vmatpush.msra.mxu0 0.0
      %365 = vmatpush.msra.mxu0 0.0
      %366 = vmatpush.msra.mxu0 0.0
      %367 = vmatpush.msra.mxu0 0.0
      %368 = vmatpush.msra.mxu0 0.0
      %369 = vmatpush.msra.mxu0 0.0
      %370 = vmatpush.msra.mxu0 0.0
      %371 = vmatpush.msra.mxu0 0.0
      %372 = vmatpush.msra.mxu0 0.0
      %373 = vmatpush.msra.mxu0 0.0
      %374 = vmatpush.msra.mxu0 %v324
      %375 = vmatmul.f32.gmra.mxu0 %v357
      %v376 = vpop.f32.mrf.mxu0
      %v377 = vadd.f32 %v354, %v376
      %378 = vdwg.mxu0
      %s379 = scalar_lea.vmem %s3, 16
      %v380 = vld [vmem:[%s379] sm:$0xff]
      %v382 = vsel %vm332, %v380, 0
      %384 = vmatpush.msra.mxu0 0.0
      %385 = vmatpush.msra.mxu0 0.0
      %386 = vmatpush.msra.mxu0 0.0
      %387 = vmatpush.msra.mxu0 0.0
      %388 = vmatpush.msra.mxu0 0.0
      %389 = vmatpush.msra.mxu0 0.0
      %390 = vmatpush.msra.mxu0 0.0
      %391 = vmatpush.msra.mxu0 0.0
      %392 = vmatpush.msra.mxu0 0.0
      %393 = vmatpush.msra.mxu0 0.0
      %394 = vmatpush.msra.mxu0 0.0
      %395 = vmatpush.msra.mxu0 0.0
      %396 = vmatpush.msra.mxu0 0.0
      %397 = vmatpush.msra.mxu0 0.0
      %398 = vmatpush.msra.mxu0 0.0
      %399 = vmatpush.msra.mxu0 %v328
      %400 = vmatmul.f32.gmra.mxu0 %v382
      %v401 = vpop.f32.mrf.mxu0
      %v402 = vadd.f32 0.0, %v401
      %403 = vdwg.mxu0
      %v404 = vadd.f32 %v377, %v402
      %405 = vadd.xlane.f32.xlu0 %v404
      %v406 = vpop.xlane.xlu0 %405
      %v407 = vmul.f32 %v404, %v404
      %408 = vadd.xlane.f32.xlu0 %v407
      %v409 = vpop.xlane.xlu0 %408
      %vm410 = vcmask 7168
      %v411 = vsel %vm410, %v406, %v409
      %vm412 = vcmask 15360
      %413 = vst.msk [vmem:[%s298] sm:$0xff] %vm412, %v411
      %414 = vst [vmem:[%s294] sm:$0xff] %v404
      %p415 = scmp.lt.s32.totalorder %s19, 1
      %s416 = scalar_select %p415, %s19, 1
      %s417 = smul.addr %s416, 8
      %s418 = scalar_lea.vmem %s6, %s417
      %p419 = scmp.lt.s32.totalorder %s19, 1
      %s420 = scalar_select %p419, %s19, 1
      %s421 = smul.addr %s420, 8
      %s422 = scalar_lea.vmem %s7, %s421
      // Predicated region
      $region45: #{double_conv.3} parent=43 // pred_check
        %p423 = pneg %p173
      $region46: #{double_conv.3} parent=43 // pred_check_branch
        %425 = sbr.rel (%p423) target = $region48
      $region47: #{double_conv.3} parent=43 // pred_region
        _
      $region48: #{double_conv.3} parent=43 // pred_fallthru
        _
      // Predicated region
      $region49: #{double_conv.3} parent=43 // pred_check
        %p426 = pneg %p199
      $region50: #{double_conv.3} parent=43 // pred_check_branch
        %428 = sbr.rel (%p426) target = $region52
      $region51: #{double_conv.3} parent=43 // pred_region
        _
      $region52: #{double_conv.3} parent=43 // pred_fallthru
        _
    $region44: #{double_conv.3} parent=5 // pred_fallthru
      _
    %p429 = scmp.le.s32.totalorder 2, %s14
    // Predicated region
    $region53: #{double_conv.3} parent=5 // pred_check
      %p430 = pneg %p429
    $region54: #{double_conv.3} parent=5 // pred_check_branch
      %432 = sbr.rel (%p430) target = $region56
    $region55: #{double_conv.3} parent=5 // pred_region
      %s433 = ssub.s32 %s14, 2
      // Predicated region
      $region57: #{double_conv.3} parent=55 // pred_check
        %p434 = pneg %p179
      $region58: #{double_conv.3} parent=55 // pred_check_branch
        %436 = sbr.rel (%p434) target = $region60
      $region59: #{double_conv.3} parent=55 // pred_region
        %p437 = scmp.lt.s32.totalorder %s20, 1
        %s438 = scalar_select %p437, %s20, 1
        %s439 = smul.addr %s438, 8
        %s440 = scalar_lea.vmem %s6, %s439
      $region60: #{double_conv.3} parent=55 // pred_fallthru
        _
      // Predicated region
      $region61: #{double_conv.3} parent=55 // pred_check
        %p441 = pneg %p205
      $region62: #{double_conv.3} parent=55 // pred_check_branch
        %443 = sbr.rel (%p441) target = $region64
      $region63: #{double_conv.3} parent=55 // pred_region
        %p444 = scmp.lt.s32.totalorder %s20, 1
        %s445 = scalar_select %p444, %s20, 1
        %s446 = smul.addr %s445, 8
        %s447 = scalar_lea.vmem %s7, %s446
      $region64: #{double_conv.3} parent=55 // pred_fallthru
        _
    $region56: #{double_conv.3} parent=5 // pred_fallthru
      _
  $region6: #{double_conv.3} parent=0 // loop_footer
    %s18 = sadd.s32 1, %s14
  $region7: #{double_conv.3} parent=0 // loop_footer_branch
    %13 = sbr.rel target = $region3
  $region8: #{double_conv.3} parent=0 // loop_exit
    _

</llo_original>
